<compile_context>
chip_gen: v6e
topology: v6e:2x2x1
jax: 0.10.0
libtpu: 0.0.40
codegen_flags: <defaults>
</compile_context>

<pallas_src>
import functools

import jax
import jax.numpy as jnp
import numpy as np
from jax.experimental import pallas as pl
from jax.experimental.pallas import tpu as pltpu

FRAME = 128                  # samples per frame (lane dim)
MAX_TF = 2048                # max frames per grid step (sublane dim)
QUANT_DELTA = 1.0 / 256.0    # uniform quantization step (bitrate proxy)
INV_DELTA = 256.0
_TF_CANDIDATES = (2048, 1024, 512, 256, 128, 64, 32, 16, 8)
_MAX_PAD_WASTE = 0.05        # cap on padded-frame fraction (wasted HBM traffic)


def _dct_matrix(n: int) -> np.ndarray:
    """Orthonormal DCT-II matrix D (n x n); coeffs = x @ D.T, x = coeffs @ D."""
    k = np.arange(n)[:, None].astype(np.float64)
    m = np.arange(n)[None, :].astype(np.float64)
    d = np.sqrt(2.0 / n) * np.cos(np.pi * (m + 0.5) * k / n)
    d[0, :] *= 1.0 / np.sqrt(2.0)
    return d.astype(np.float32)


def _choose_tf(n_frames: int) -> int:
    """Pick the frames-per-step tile.

    Prefer the largest power-of-two tile (>= 1 MiB blocks) that still gives a
    grid of >= 4 steps (keeps both v7x TensorCores busy with a warm pipeline)
    and wastes < ~5% of the HBM traffic on padding. Fall back to grid >= 2,
    then to the minimum sublane tile of 8.
    """
    def stats(tf):
        padded = -(-n_frames // tf) * tf
        grid = padded // tf
        waste = (padded - n_frames) / padded
        return grid, waste

    for tf in _TF_CANDIDATES:
        grid, waste = stats(tf)
        if grid >= 4 and waste <= _MAX_PAD_WASTE:
            return tf
    for tf in _TF_CANDIDATES:
        grid, waste = stats(tf)
        if grid >= 2 and waste <= _MAX_PAD_WASTE:
            return tf
    return 8


def _mxu_dtype_name() -> str:
    """bf16 on v5e (f32 matmul would flip it compute-bound), f32 on v6e/v7x."""
    try:
        kind = jax.devices()[0].device_kind.lower()
    except Exception:  # pragma: no cover - defensive; default to bf16
        kind = ""
    if "v5e" in kind or "v5 lite" in kind or "v5lite" in kind:
        return "bfloat16"
    return "float32"


def _mp3_kernel(x_ref, fwd_ref, inv_ref, o_ref):
    # x_ref:   (TF, FRAME)     time-domain frames (f32)
    # fwd_ref: (FRAME, FRAME)  INV_DELTA * (mask * D).T  (pre-transposed, mask
    #                          and quant scale folded in), MXU compute dtype
    # inv_ref: (FRAME, FRAME)  QUANT_DELTA * D (inverse transform, scale folded)
    cdt = fwd_ref.dtype
    x = x_ref[...].astype(cdt)
    # Forward transform (MXU); band-limit + 1/delta already folded in.
    coeffs = jnp.dot(x, fwd_ref[...], preferred_element_type=jnp.float32)
    # Uniform quantization: scales are in the matrices, only the round remains.
    q = jnp.round(coeffs)
    # Inverse transform (MXU) back to the time domain (delta folded in).
    o_ref[...] = jnp.dot(q.astype(cdt), inv_ref[...],
                         preferred_element_type=jnp.float32)


@functools.partial(jax.jit, static_argnames=("keep_bins", "compute_dtype"))
def _mp3_compress_impl(audio: jax.Array, keep_bins: int,
                       compute_dtype: str) -> jax.Array:
    audio = audio.astype(jnp.float32)
    (length,) = audio.shape
    cdt = jnp.dtype(compute_dtype)

    # Frame count before tile padding, then pad to a multiple of TF frames.
    n_frames_min = -(-length // FRAME)
    tf = _choose_tf(n_frames_min)
    n_frames = -(-n_frames_min // tf) * tf
    padded_len = n_frames * FRAME
    frames = jnp.pad(audio, (0, padded_len - length)).reshape(n_frames, FRAME)

    # Host-precomputed matrices: band-limit mask and the (exact power-of-two)
    # quantization scales folded in, forward matrix already transposed.
    d = _dct_matrix(FRAME)
    mask = (np.arange(FRAME) < keep_bins).astype(np.float32)
    fwd_np = (mask[:, None] * d).T * INV_DELTA   # x @ fwd -> coeffs / delta
    inv_np = d * QUANT_DELTA                      # round(.) @ inv -> samples
    fwd = jnp.asarray(fwd_np, dtype=cdt)
    inv = jnp.asarray(inv_np, dtype=cdt)

    grid = (n_frames // tf,)
    cost = pl.CostEstimate(
        flops=2 * 2 * n_frames * FRAME * FRAME,
        transcendentals=0,
        bytes_accessed=2 * n_frames * FRAME * 4 + 2 * FRAME * FRAME * cdt.itemsize,
    )

    out_frames = pl.pallas_call(
        _mp3_kernel,
        out_shape=jax.ShapeDtypeStruct((n_frames, FRAME), jnp.float32),
        grid_spec=pltpu.PrefetchScalarGridSpec(
            num_scalar_prefetch=0,
            grid=grid,
            in_specs=[
                pl.BlockSpec((tf, FRAME), lambda i: (i, 0)),
                # Constant (0, 0) index_map: fetched once, not per grid step.
                pl.BlockSpec((FRAME, FRAME), lambda i: (0, 0)),
                pl.BlockSpec((FRAME, FRAME), lambda i: (0, 0)),
            ],
            out_specs=pl.BlockSpec((tf, FRAME), lambda i: (i, 0)),
        ),
        compiler_params=pltpu.CompilerParams(
            dimension_semantics=("parallel",)),
        cost_estimate=cost,
    )(frames, fwd, inv)

    return out_frames.reshape(padded_len)[:length]


def mp3_compress(audio: jax.Array, keep_bins: int = 64) -> jax.Array:
    """Surrogate MP3 compression. audio: 1-D float32 waveform -> same shape."""
    return _mp3_compress_impl(audio, keep_bins, _mxu_dtype_name())


if __name__ == "__main__":
    key = jax.random.PRNGKey(0)
    # Small synthetic waveform (~0.09 s at sr=22050), 1-D like the module's audio.
    audio = jax.random.uniform(key, (2048,), jnp.float32, minval=-1.0, maxval=1.0)

    out = mp3_compress(audio, keep_bins=64)
    out = jax.block_until_ready(out)

    assert out.shape == audio.shape, (out.shape, audio.shape)
    assert out.dtype == jnp.float32
    assert bool(jnp.all(jnp.isfinite(out)))
    print("KERNEL_OK")
</pallas_src>

<mosaic_0001>
module attributes {stable_mosaic.version = 11 : i64} {
  func.func @_mp3_kernel(%arg0: i32, %arg1: memref<8x128xf32, #tpu.memory_space<vmem>>, %arg2: memref<128x128xf32, #tpu.memory_space<vmem>>, %arg3: memref<128x128xf32, #tpu.memory_space<vmem>>, %arg4: memref<8x128xf32, #tpu.memory_space<vmem>>) attributes {dimension_semantics = [#tpu.dimension_semantics<parallel>], iteration_bounds = array<i64: 2>, scalar_prefetch = 0 : i64, scratch_operands = 0 : i64, tpu.core_type = #tpu.core_type<tc>, window_params = [{transform_indices = @transform_0, window_bounds = array<i64: 8, 128>}, {pipeline_mode = #tpu.pipeline_mode<synchronous>, transform_indices = @transform_1, window_bounds = array<i64: 128, 128>}, {pipeline_mode = #tpu.pipeline_mode<synchronous>, transform_indices = @transform_2, window_bounds = array<i64: 128, 128>}, {transform_indices = @transform_3, window_bounds = array<i64: 8, 128>}]} {
    %c0 = arith.constant 0 : index
    %c0_0 = arith.constant 0 : index
    %0 = vector.load %arg1[%c0, %c0_0] : memref<8x128xf32, #tpu.memory_space<vmem>>, vector<8x128xf32>
    %c0_1 = arith.constant 0 : index
    %c0_2 = arith.constant 0 : index
    %1 = vector.load %arg2[%c0_1, %c0_2] : memref<128x128xf32, #tpu.memory_space<vmem>>, vector<128x128xf32>
    %cst = arith.constant dense<0.000000e+00> : vector<8x128xf32>
    %2 = tpu.matmul %0, %1, %cst {dimension_numbers = #tpu.dot_dimension_numbers<[1], [0], [0], [1], [0, 0, 1, 1], [], []>} : vector<8x128xf32>, vector<128x128xf32>, vector<8x128xf32> -> vector<8x128xf32>
    %3 = math.roundeven %2 : vector<8x128xf32>
    %c0_3 = arith.constant 0 : index
    %c0_4 = arith.constant 0 : index
    %4 = vector.load %arg3[%c0_3, %c0_4] : memref<128x128xf32, #tpu.memory_space<vmem>>, vector<128x128xf32>
    %cst_5 = arith.constant dense<0.000000e+00> : vector<8x128xf32>
    %5 = tpu.matmul %3, %4, %cst_5 {dimension_numbers = #tpu.dot_dimension_numbers<[1], [0], [0], [1], [0, 0, 1, 1], [], []>} : vector<8x128xf32>, vector<128x128xf32>, vector<8x128xf32> -> vector<8x128xf32>
    %c0_6 = arith.constant 0 : index
    %c0_7 = arith.constant 0 : index
    %6 = vector.load %arg4[%c0_6, %c0_7] : memref<8x128xf32, #tpu.memory_space<vmem>>, vector<8x128xf32>
    tpu.vector_store %arg4[%c0_6, %c0_7], %5 {strides = array<i32>} : memref<8x128xf32, #tpu.memory_space<vmem>>, vector<8x128xf32>,
    return
  }
  func.func @transform_0(%arg0: i32) -> (i32, i32) {
    %c0_i32 = arith.constant 0 : i32
    %c0_i32_0 = arith.constant 0 : i32
    return %arg0, %c0_i32 : i32, i32
  }
  func.func @transform_1(%arg0: i32) -> (i32, i32) {
    %c0_i32 = arith.constant 0 : i32
    %c0_i32_0 = arith.constant 0 : i32
    %c0_i32_1 = arith.constant 0 : i32
    return %c0_i32, %c0_i32_0 : i32, i32
  }
  func.func @transform_2(%arg0: i32) -> (i32, i32) {
    %c0_i32 = arith.constant 0 : i32
    %c0_i32_0 = arith.constant 0 : i32
    %c0_i32_1 = arith.constant 0 : i32
    return %c0_i32, %c0_i32_0 : i32, i32
  }
  func.func @transform_3(%arg0: i32) -> (i32, i32) {
    %c0_i32 = arith.constant 0 : i32
    %c0_i32_0 = arith.constant 0 : i32
    return %arg0, %c0_i32 : i32, i32
  }
}

</mosaic_0001>

<llo_original>
// kernel: _mp3_compress_impl.1
$region0: #{_mp3_compress_impl.1}
  #allocation0 [shape = 'u32[]', space=smem, size = 0x4, offset = 0x4, fixed_abs, tag = 'smem constant byte address 0x4 - core index']
  #allocation1 [shape = 'u32[144,128]{1,0:T(1,128)}', space=vmem, size = 0x12000, scoped, tag = 'internal scratch']
  %s0 = inlined_call_operand.hbm [shape: f32[16,128], index: 0, kind: input, shape index: {}]
  %s1 = inlined_call_operand.hbm [shape: f32[128,128], index: 1, kind: input, shape index: {}]
  %s2 = inlined_call_operand.hbm [shape: f32[128,128], index: 2, kind: input, shape index: {}]
  %s3 = inlined_call_operand.hbm [shape: f32[16,128], index: 3, kind: output, shape index: {}]
  %s4 = sld [smem:[#allocation0]]
  $region57: #{_mp3_compress_impl.1} parent=0
    _
  %s6 = ssub.s32 1, %s4
  %s7 = scalar_select 0, %s6, %s4
  $region1: #{_mp3_compress_impl.1} parent=0
    #allocation2 [shape = 'u8[8192]{0}', space=vmem, size = 0x2000, scoped, tag = 'input window, operand 0']
    #allocation3 [shape = 's32[2]{0}', space=sflag, size = 0x8, scoped, tag = 'scoped memory for _mp3_compress_impl.1']
    #allocation4 [shape = 's32[2]{0}', space=sflag, size = 0x8, scoped, tag = 'scoped memory for _mp3_compress_impl.1']
    #allocation5 [shape = 'u8[65536]{0}', space=vmem, size = 0x10000, scoped, tag = 'input window, operand 1, single buffered']
    #allocation6 [shape = 's32[1]{0}', space=sflag, size = 0x4, scoped, tag = 'scoped memory for _mp3_compress_impl.1']
    #allocation7 [shape = 'u8[65536]{0}', space=vmem, size = 0x10000, scoped, tag = 'input window, operand 2, single buffered']
    #allocation8 [shape = 'u8[8192]{0}', space=vmem, size = 0x2000, scoped, tag = 'output window, operand 0']
    %8 = vsyncpa [#allocation3], 0
    %s9 = scalar_lea.sflag [#allocation3], 1
    %10 = vsyncpa %s9, 0
    %11 = vsyncpa [#allocation6], 0
    %12 = vsyncpa [#allocation4], 0
    %s13 = scalar_lea.sflag [#allocation4], 1
    %14 = vsyncpa %s13, 0
    loop: start=0, step=1, limit=4
    $region2: #{_mp3_compress_impl.1} parent=1 // loop_pre_header
      _
    $region3: #{_mp3_compress_impl.1} parent=1 // loop_header
      %s16 = sphi 0, %s20
      %p17 = scmp.ge.s32.totalorder %s16, 4
      %s26 = sphi 0, %s28
      %s29 = sphi 0, %s26
      %s30 = sphi 0, %s29
      %s46 = sphi 0, %s30
      %s50 = sphi 0, %s50
      %s52 = sphi 0, %s50
      %s53 = sphi 0, %s52
      %s67 = sphi 0, %s53
      %s71 = sphi 0, %s71
      %s73 = sphi 0, %s71
      %s74 = sphi 0, %s73
      %s88 = sphi 0, %s74
      %s94 = sphi 0, %s96
      %s97 = sphi 0, %s94
      %s98 = sphi 0, %s97
      %s114 = sphi 0, %s98
    $region4: #{_mp3_compress_impl.1} parent=1 // loop_header_branch
      %19 = sbr.rel (%p17) target = $region8
    $region5: #{_mp3_compress_impl.1} parent=1 // loop_body
      %s21 = ssub.s32 %s16, 1
      %s22 = ssub.s32 %s16, 2
      %s23 = sadd.s32 %s16, 1
      %s24 = ssub.s32 %s16, %s23
      %p25 = scmp.eq.s32.totalorder %s24, 0
      %s27 = sadd.s32 %s26, 1
      %s28 = scalar_select %p25, %s26, %s27
      %p31 = pneg %p25
      %p32 = scmp.eq.s32.totalorder %s16, 1
      %p33 = por %p31, %p32
      %p34 = scmp.ne.s32.totalorder %s26, %s29
      %p35 = scmp.eq.s32.totalorder %s16, 0
      %p36 = por %p34, %p35
      %p37 = scmp.ne.s32.totalorder %s26, %s29
      %p38 = scmp.eq.s32.totalorder %s21, 1
      %p39 = por %p37, %p38
      %p40 = scmp.ne.s32.totalorder %s29, %s30
      %p41 = scmp.eq.s32.totalorder %s21, 0
      %p42 = por %p40, %p41
      %p43 = scmp.ne.s32.totalorder %s29, %s30
      %p44 = scmp.eq.s32.totalorder %s22, 1
      %p45 = por %p43, %p44
      %p47 = scmp.ne.s32.totalorder %s30, %s46
      %p48 = scmp.eq.s32.totalorder %s22, 0
      %p49 = por %p47, %p48
      %s51 = sadd.s32 %s50, 1
      %p54 = scmp.eq.s32.totalorder %s16, 1
      %p55 = scmp.ne.s32.totalorder %s50, %s52
      %p56 = scmp.eq.s32.totalorder %s16, 0
      %p57 = por %p55, %p56
      %p58 = scmp.ne.s32.totalorder %s50, %s52
      %p59 = scmp.eq.s32.totalorder %s21, 1
      %p60 = por %p58, %p59
      %p61 = scmp.ne.s32.totalorder %s52, %s53
      %p62 = scmp.eq.s32.totalorder %s21, 0
      %p63 = por %p61, %p62
      %p64 = scmp.ne.s32.totalorder %s52, %s53
      %p65 = scmp.eq.s32.totalorder %s22, 1
      %p66 = por %p64, %p65
      %p68 = scmp.ne.s32.totalorder %s53, %s67
      %p69 = scmp.eq.s32.totalorder %s22, 0
      %p70 = por %p68, %p69
      %s72 = sadd.s32 %s71, 1
      %p75 = scmp.eq.s32.totalorder %s16, 1
      %p76 = scmp.ne.s32.totalorder %s71, %s73
      %p77 = scmp.eq.s32.totalorder %s16, 0
      %p78 = por %p76, %p77
      %p79 = scmp.ne.s32.totalorder %s71, %s73
      %p80 = scmp.eq.s32.totalorder %s21, 1
      %p81 = por %p79, %p80
      %p82 = scmp.ne.s32.totalorder %s73, %s74
      %p83 = scmp.eq.s32.totalorder %s21, 0
      %p84 = por %p82, %p83
      %p85 = scmp.ne.s32.totalorder %s73, %s74
      %p86 = scmp.eq.s32.totalorder %s22, 1
      %p87 = por %p85, %p86
      %p89 = scmp.ne.s32.totalorder %s74, %s88
      %p90 = scmp.eq.s32.totalorder %s22, 0
      %p91 = por %p89, %p90
      %s92 = ssub.s32 %s16, %s23
      %p93 = scmp.eq.s32.totalorder %s92, 0
      %s95 = sadd.s32 %s94, 1
      %s96 = scalar_select %p93, %s94, %s95
      %p99 = pneg %p93
      %p100 = scmp.eq.s32.totalorder %s16, 1
      %p101 = por %p99, %p100
      %p102 = scmp.ne.s32.totalorder %s94, %s97
      %p103 = scmp.eq.s32.totalorder %s16, 0
      %p104 = por %p102, %p103
      %p105 = scmp.ne.s32.totalorder %s94, %s97
      %p106 = scmp.eq.s32.totalorder %s21, 1
      %p107 = por %p105, %p106
      %p108 = scmp.ne.s32.totalorder %s97, %s98
      %p109 = scmp.eq.s32.totalorder %s21, 0
      %p110 = por %p108, %p109
      %p111 = scmp.ne.s32.totalorder %s97, %s98
      %p112 = scmp.eq.s32.totalorder %s22, 1
      %p113 = por %p111, %p112
      %p115 = scmp.ne.s32.totalorder %s98, %s114
      %p116 = scmp.eq.s32.totalorder %s22, 0
      %p117 = por %p115, %p116
      %p118 = scmp.le.s32.totalorder 1, %s16
      %p119 = scmp.lt.s32.totalorder %s16, 3
      %p120 = pnand %p118, %p119
      %p121 = pneg %p120
      // Predicated region
      $region9: #{_mp3_compress_impl.1} parent=5 // pred_check
        _
      $region10: #{_mp3_compress_impl.1} parent=5 // pred_check_branch
        %123 = sbr.rel (%p120) target = $region12
      $region11: #{_mp3_compress_impl.1} parent=5 // pred_region
        %s124 = ssub.s32 %s16, 1
        // Predicated region
        $region13: #{_mp3_compress_impl.1} parent=11 // pred_check
          %p125 = pneg %p63
        $region14: #{_mp3_compress_impl.1} parent=11 // pred_check_branch
          %127 = sbr.rel (%p125) target = $region16
        $region15: #{_mp3_compress_impl.1} parent=11 // pred_region
          %s129 = ssub.s32 2048, 2048
          %130 = vsyncadd [#allocation6], %s129
          %s131 = sshll.u32 [#allocation5], 4
          %s132 = int_to_ptr.vmem [resolvable:$true] %s131
          %137 = dma.hbm_to_vmem [thread:$0]  %s1, 2048, %s132, [#allocation6], 128, 128, 8
        $region16: #{_mp3_compress_impl.1} parent=11 // pred_fallthru
          _
        // Predicated region
        $region17: #{_mp3_compress_impl.1} parent=11 // pred_check
          %p138 = pneg %p84
        $region18: #{_mp3_compress_impl.1} parent=11 // pred_check_branch
          %140 = sbr.rel (%p138) target = $region20
        $region19: #{_mp3_compress_impl.1} parent=11 // pred_region
          %s142 = ssub.s32 2048, 2048
          %143 = vsyncadd [#allocation6], %s142
          %s144 = sshll.u32 [#allocation7], 4
          %s145 = int_to_ptr.vmem [resolvable:$true] %s144
          %150 = dma.hbm_to_vmem [thread:$0]  %s2, 2048, %s145, [#allocation6], 128, 128, 8
        $region20: #{_mp3_compress_impl.1} parent=11 // pred_fallthru
          _
      $region12: #{_mp3_compress_impl.1} parent=5 // pred_fallthru
        _
      %p151 = scmp.lt.s32.totalorder %s16, 2
      // Predicated region
      $region21: #{_mp3_compress_impl.1} parent=5 // pred_check
        %p152 = pneg %p151
      $region22: #{_mp3_compress_impl.1} parent=5 // pred_check_branch
        %154 = sbr.rel (%p152) target = $region24
      $region23: #{_mp3_compress_impl.1} parent=5 // pred_region
        // Predicated region
        $region25: #{_mp3_compress_impl.1} parent=23 // pred_check
          %p155 = pneg %p36
        $region26: #{_mp3_compress_impl.1} parent=23 // pred_check_branch
          %157 = sbr.rel (%p155) target = $region28
        $region27: #{_mp3_compress_impl.1} parent=23 // pred_region
          %s158 = sand.u32 %s26, 1
          %s159 = scalar_lea.sflag [#allocation3], %s158
          %s160 = sand.u32 %s26, 1
          %s161 = smul.addr %s160, 8
          %s162 = scalar_lea.vmem [#allocation2], %s161
          %s164 = ssub.s32 128, 128
          %165 = vsyncadd %s159, %s164
          %s166 = smul.addr %s16, 128
          %s167 = scalar_lea.hbm %s0, %s166
          %s169 = sshll.u32 %s162, 4
          %s170 = int_to_ptr.vmem [resolvable:$true] %s169
          %172 = dma.hbm_to_vmem [thread:$0]  %s167, 128, %s170, %s159
        $region28: #{_mp3_compress_impl.1} parent=23 // pred_fallthru
          _
      $region24: #{_mp3_compress_impl.1} parent=5 // pred_fallthru
        _
      %p173 = scmp.le.s32.totalorder 1, %s16
      %p174 = scmp.lt.s32.totalorder %s16, 3
      %p175 = pnand %p173, %p174
      %p176 = pneg %p175
      // Predicated region
      $region29: #{_mp3_compress_impl.1} parent=5 // pred_check
        _
      $region30: #{_mp3_compress_impl.1} parent=5 // pred_check_branch
        %178 = sbr.rel (%p175) target = $region32
      $region31: #{_mp3_compress_impl.1} parent=5 // pred_region
        %s179 = ssub.s32 %s16, 1
        %s180 = sand.u32 %s29, 1
        %s181 = scalar_lea.sflag [#allocation3], %s180
        %s182 = sand.u32 %s29, 1
        %s183 = smul.addr %s182, 8
        %s184 = scalar_lea.vmem [#allocation2], %s183
        // Predicated region
        $region33: #{_mp3_compress_impl.1} parent=31 // pred_check
          %p185 = pneg %p42
        $region34: #{_mp3_compress_impl.1} parent=31 // pred_check_branch
          %187 = sbr.rel (%p185) target = $region36
        $region35: #{_mp3_compress_impl.1} parent=31 // pred_region
          %188 = dma.done %s181, 128
        $region36: #{_mp3_compress_impl.1} parent=31 // pred_fallthru
          _
        // Predicated region
        $region37: #{_mp3_compress_impl.1} parent=31 // pred_check
          %p189 = pneg %p63
        $region38: #{_mp3_compress_impl.1} parent=31 // pred_check_branch
          %191 = sbr.rel (%p189) target = $region40
        $region39: #{_mp3_compress_impl.1} parent=31 // pred_region
          %192 = dma.done [#allocation6], 2048
        $region40: #{_mp3_compress_impl.1} parent=31 // pred_fallthru
          _
        // Predicated region
        $region41: #{_mp3_compress_impl.1} parent=31 // pred_check
          %p193 = pneg %p84
        $region42: #{_mp3_compress_impl.1} parent=31 // pred_check_branch
          %195 = sbr.rel (%p193) target = $region44
        $region43: #{_mp3_compress_impl.1} parent=31 // pred_region
          %196 = dma.done [#allocation6], 2048
        $region44: #{_mp3_compress_impl.1} parent=31 // pred_fallthru
          _
        %s197 = sand.u32 %s29, 1
        %s198 = scalar_lea.sflag [#allocation3], %s197
        %s199 = sand.u32 %s29, 1
        %s200 = smul.addr %s199, 8
        %s201 = scalar_lea.vmem [#allocation2], %s200
        %p202 = pneg %p42
        %p203 = pneg %p39
        %p204 = pneg %p63
        %p205 = pneg %p60
        %p206 = pneg %p84
        %p207 = pneg %p81
        %p208 = pneg %p110
        %p209 = pneg %p107
        %s210 = sand.u32 %s97, 1
        %s211 = scalar_lea.sflag [#allocation4], %s210
        %s212 = sand.u32 %s97, 1
        %s213 = smul.addr %s212, 8
        %s214 = scalar_lea.vmem [#allocation8], %s213
        %v215 = vld [vmem:[%s184] sm:$0xff]
        %v216 = vld [vmem:[#allocation5] sm:$0xff]
        %v217 = vld [vmem:[#allocation5 + $0x8] sm:$0xff]
        %v218 = vld [vmem:[#allocation5 + $0x10] sm:$0xff]
        %v219 = vld [vmem:[#allocation5 + $0x18] sm:$0xff]
        %v220 = vld [vmem:[#allocation5 + $0x20] sm:$0xff]
        %v221 = vld [vmem:[#allocation5 + $0x28] sm:$0xff]
        %v222 = vld [vmem:[#allocation5 + $0x30] sm:$0xff]
        %v223 = vld [vmem:[#allocation5 + $0x38] sm:$0xff]
        %v224 = vld [vmem:[#allocation5 + $0x40] sm:$0xff]
        %v225 = vld [vmem:[#allocation5 + $0x48] sm:$0xff]
        %v226 = vld [vmem:[#allocation5 + $0x50] sm:$0xff]
        %v227 = vld [vmem:[#allocation5 + $0x58] sm:$0xff]
        %v228 = vld [vmem:[#allocation5 + $0x60] sm:$0xff]
        %v229 = vld [vmem:[#allocation5 + $0x68] sm:$0xff]
        %v230 = vld [vmem:[#allocation5 + $0x70] sm:$0xff]
        %v231 = vld [vmem:[#allocation5 + $0x78] sm:$0xff]
        %232 = vmatprep.subr.mxu0 0.0
        %233 = vmatpush1.msra.mxu0 %v231
        %234 = vmatprep.subr.mxu0 0.0
        %235 = vmatpush1.msra.mxu0 %v230
        %236 = vmatprep.subr.mxu0 0.0
        %237 = vmatpush1.msra.mxu0 %v229
        %238 = vmatprep.subr.mxu0 0.0
        %239 = vmatpush1.msra.mxu0 %v228
        %240 = vmatprep.subr.mxu0 0.0
        %241 = vmatpush1.msra.mxu0 %v227
        %242 = vmatprep.subr.mxu0 0.0
        %243 = vmatpush1.msra.mxu0 %v226
        %244 = vmatprep.subr.mxu0 0.0
        %245 = vmatpush1.msra.mxu0 %v225
        %246 = vmatprep.subr.mxu0 0.0
        %247 = vmatpush1.msra.mxu0 %v224
        %248 = vmatprep.subr.mxu0 0.0
        %249 = vmatpush1.msra.mxu0 %v223
        %250 = vmatprep.subr.mxu0 0.0
        %251 = vmatpush1.msra.mxu0 %v222
        %252 = vmatprep.subr.mxu0 0.0
        %253 = vmatpush1.msra.mxu0 %v221
        %254 = vmatprep.subr.mxu0 0.0
        %255 = vmatpush1.msra.mxu0 %v220
        %256 = vmatprep.subr.mxu0 0.0
        %257 = vmatpush1.msra.mxu0 %v219
        %258 = vmatprep.subr.mxu0 0.0
        %259 = vmatpush1.msra.mxu0 %v218
        %260 = vmatprep.subr.mxu0 0.0
        %261 = vmatpush1.msra.mxu0 %v217
        %262 = vmatprep.subr.mxu0 0.0
        %263 = vmatpush1.msra.mxu0 %v216
        %264 = vmatprep.subr.mxu0 0.0
        %265 = vmatpush2.msra.mxu0 0.0
        %266 = vmatprep.subr.mxu0 0.0
        %267 = vmatpush2.msra.mxu0 0.0
        %268 = vmatprep.subr.mxu0 0.0
        %269 = vmatpush2.msra.mxu0 0.0
        %270 = vmatprep.subr.mxu0 0.0
        %271 = vmatpush2.msra.mxu0 0.0
        %272 = vmatprep.subr.mxu0 0.0
        %273 = vmatpush2.msra.mxu0 0.0
        %274 = vmatprep.subr.mxu0 0.0
        %275 = vmatpush2.msra.mxu0 0.0
        %276 = vmatprep.subr.mxu0 0.0
        %277 = vmatpush2.msra.mxu0 0.0
        %278 = vmatprep.subr.mxu0 0.0
        %279 = vmatpush2.msra.mxu0 0.0
        %280 = vmatprep.subr.mxu0 0.0
        %281 = vmatpush2.msra.mxu0 0.0
        %282 = vmatprep.subr.mxu0 0.0
        %283 = vmatpush2.msra.mxu0 0.0
        %284 = vmatprep.subr.mxu0 0.0
        %285 = vmatpush2.msra.mxu0 0.0
        %286 = vmatprep.subr.mxu0 0.0
        %287 = vmatpush2.msra.mxu0 0.0
        %288 = vmatprep.subr.mxu0 0.0
        %289 = vmatpush2.msra.mxu0 0.0
        %290 = vmatprep.subr.mxu0 0.0
        %291 = vmatpush2.msra.mxu0 0.0
        %292 = vmatprep.subr.mxu0 0.0
        %293 = vmatpush2.msra.mxu0 0.0
        %294 = vmatprep.subr.mxu0 0.0
        %295 = vmatpush2.msra.mxu0 0.0
        %296 = vmatprep.mubr.f32.mxu0 0.0
        %297 = vmatmul.mubr.f32.gmra.mxu0 %v215
        %v298 = vpop.f32.mrf.mxu0
        %v299 = vadd.f32 0.0, %v298
        %v300 = vpop.f32.mrf.mxu0
        %301 = vdwg.mxu0
        %v302 = vround.ne.pseudo %v299
        %v303 = vld [vmem:[#allocation7] sm:$0xff]
        %v304 = vld [vmem:[#allocation7 + $0x8] sm:$0xff]
        %v305 = vld [vmem:[#allocation7 + $0x10] sm:$0xff]
        %v306 = vld [vmem:[#allocation7 + $0x18] sm:$0xff]
        %v307 = vld [vmem:[#allocation7 + $0x20] sm:$0xff]
        %v308 = vld [vmem:[#allocation7 + $0x28] sm:$0xff]
        %v309 = vld [vmem:[#allocation7 + $0x30] sm:$0xff]
        %v310 = vld [vmem:[#allocation7 + $0x38] sm:$0xff]
        %v311 = vld [vmem:[#allocation7 + $0x40] sm:$0xff]
        %v312 = vld [vmem:[#allocation7 + $0x48] sm:$0xff]
        %v313 = vld [vmem:[#allocation7 + $0x50] sm:$0xff]
        %v314 = vld [vmem:[#allocation7 + $0x58] sm:$0xff]
        %v315 = vld [vmem:[#allocation7 + $0x60] sm:$0xff]
        %v316 = vld [vmem:[#allocation7 + $0x68] sm:$0xff]
        %v317 = vld [vmem:[#allocation7 + $0x70] sm:$0xff]
        %v318 = vld [vmem:[#allocation7 + $0x78] sm:$0xff]
        %319 = vmatprep.subr.mxu0 0.0
        %320 = vmatpush1.msra.mxu0 %v318
        %321 = vmatprep.subr.mxu0 0.0
        %322 = vmatpush1.msra.mxu0 %v317
        %323 = vmatprep.subr.mxu0 0.0
        %324 = vmatpush1.msra.mxu0 %v316
        %325 = vmatprep.subr.mxu0 0.0
        %326 = vmatpush1.msra.mxu0 %v315
        %327 = vmatprep.subr.mxu0 0.0
        %328 = vmatpush1.msra.mxu0 %v314
        %329 = vmatprep.subr.mxu0 0.0
        %330 = vmatpush1.msra.mxu0 %v313
        %331 = vmatprep.subr.mxu0 0.0
        %332 = vmatpush1.msra.mxu0 %v312
        %333 = vmatprep.subr.mxu0 0.0
        %334 = vmatpush1.msra.mxu0 %v311
        %335 = vmatprep.subr.mxu0 0.0
        %336 = vmatpush1.msra.mxu0 %v310
        %337 = vmatprep.subr.mxu0 0.0
        %338 = vmatpush1.msra.mxu0 %v309
        %339 = vmatprep.subr.mxu0 0.0
        %340 = vmatpush1.msra.mxu0 %v308
        %341 = vmatprep.subr.mxu0 0.0
        %342 = vmatpush1.msra.mxu0 %v307
        %343 = vmatprep.subr.mxu0 0.0
        %344 = vmatpush1.msra.mxu0 %v306
        %345 = vmatprep.subr.mxu0 0.0
        %346 = vmatpush1.msra.mxu0 %v305
        %347 = vmatprep.subr.mxu0 0.0
        %348 = vmatpush1.msra.mxu0 %v304
        %349 = vmatprep.subr.mxu0 0.0
        %350 = vmatpush1.msra.mxu0 %v303
        %351 = vmatprep.subr.mxu0 0.0
        %352 = vmatpush2.msra.mxu0 0.0
        %353 = vmatprep.subr.mxu0 0.0
        %354 = vmatpush2.msra.mxu0 0.0
        %355 = vmatprep.subr.mxu0 0.0
        %356 = vmatpush2.msra.mxu0 0.0
        %357 = vmatprep.subr.mxu0 0.0
        %358 = vmatpush2.msra.mxu0 0.0
        %359 = vmatprep.subr.mxu0 0.0
        %360 = vmatpush2.msra.mxu0 0.0
        %361 = vmatprep.subr.mxu0 0.0
        %362 = vmatpush2.msra.mxu0 0.0
        %363 = vmatprep.subr.mxu0 0.0
        %364 = vmatpush2.msra.mxu0 0.0
        %365 = vmatprep.subr.mxu0 0.0
        %366 = vmatpush2.msra.mxu0 0.0
        %367 = vmatprep.subr.mxu0 0.0
        %368 = vmatpush2.msra.mxu0 0.0
        %369 = vmatprep.subr.mxu0 0.0
        %370 = vmatpush2.msra.mxu0 0.0
        %371 = vmatprep.subr.mxu0 0.0
        %372 = vmatpush2.msra.mxu0 0.0
        %373 = vmatprep.subr.mxu0 0.0
        %374 = vmatpush2.msra.mxu0 0.0
        %375 = vmatprep.subr.mxu0 0.0
        %376 = vmatpush2.msra.mxu0 0.0
        %377 = vmatprep.subr.mxu0 0.0
        %378 = vmatpush2.msra.mxu0 0.0
        %379 = vmatprep.subr.mxu0 0.0
        %380 = vmatpush2.msra.mxu0 0.0
        %381 = vmatprep.subr.mxu0 0.0
        %382 = vmatpush2.msra.mxu0 0.0
        %383 = vmatprep.mubr.f32.mxu0 0.0
        %384 = vmatmul.mubr.f32.gmra.mxu0 %v302
        %v385 = vpop.f32.mrf.mxu0
        %v386 = vadd.f32 0.0, %v385
        %v387 = vpop.f32.mrf.mxu0
        %388 = vdwg.mxu0
        %389 = vst [vmem:[%s214] sm:$0xff] %v386
        %s390 = sand.u32 %s97, 1
        %s391 = scalar_lea.sflag [#allocation4], %s390
        %s392 = sand.u32 %s97, 1
        %s393 = smul.addr %s392, 8
        %s394 = scalar_lea.vmem [#allocation8], %s393
        // Predicated region
        $region45: #{_mp3_compress_impl.1} parent=31 // pred_check
          %p395 = pneg %p107
        $region46: #{_mp3_compress_impl.1} parent=31 // pred_check_branch
          %397 = sbr.rel (%p395) target = $region48
        $region47: #{_mp3_compress_impl.1} parent=31 // pred_region
          %s399 = ssub.s32 128, 128
          %400 = vsyncadd %s391, %s399
          %s401 = smul.addr %s21, 128
          %s402 = scalar_lea.hbm %s3, %s401
          %s404 = sshll.u32 %s394, 4
          %s405 = int_to_ptr.vmem [resolvable:$true] %s404
          %407 = dma.vmem_to_hbm [thread:$0]  %s405, 128, %s402, %s391
        $region48: #{_mp3_compress_impl.1} parent=31 // pred_fallthru
          _
      $region32: #{_mp3_compress_impl.1} parent=5 // pred_fallthru
        _
      %p408 = scmp.le.s32.totalorder 2, %s16
      // Predicated region
      $region49: #{_mp3_compress_impl.1} parent=5 // pred_check
        %p409 = pneg %p408
      $region50: #{_mp3_compress_impl.1} parent=5 // pred_check_branch
        %411 = sbr.rel (%p409) target = $region52
      $region51: #{_mp3_compress_impl.1} parent=5 // pred_region
        %s412 = ssub.s32 %s16, 2
        // Predicated region
        $region53: #{_mp3_compress_impl.1} parent=51 // pred_check
          %p413 = pneg %p113
        $region54: #{_mp3_compress_impl.1} parent=51 // pred_check_branch
          %415 = sbr.rel (%p413) target = $region56
        $region55: #{_mp3_compress_impl.1} parent=51 // pred_region
          %s416 = sand.u32 %s98, 1
          %s417 = scalar_lea.sflag [#allocation4], %s416
          %s418 = sand.u32 %s98, 1
          %s419 = smul.addr %s418, 8
          %s420 = scalar_lea.vmem [#allocation8], %s419
          %421 = dma.done %s417, 128
        $region56: #{_mp3_compress_impl.1} parent=51 // pred_fallthru
          _
      $region52: #{_mp3_compress_impl.1} parent=5 // pred_fallthru
        _
    $region6: #{_mp3_compress_impl.1} parent=1 // loop_footer
      %s20 = sadd.s32 1, %s16
    $region7: #{_mp3_compress_impl.1} parent=1 // loop_footer_branch
      %15 = sbr.rel target = $region3
    $region8: #{_mp3_compress_impl.1} parent=1 // loop_exit
      _
    %422 = vsyncpa [#allocation3], 1
    %s423 = scalar_lea.sflag [#allocation3], 1
    %424 = vsyncpa %s423, 1
    %425 = vsyncpa [#allocation6], 1
    %426 = vsyncpa [#allocation4], 1
    %s427 = scalar_lea.sflag [#allocation4], 1
    %428 = vsyncpa %s427, 1

</llo_original>
